<compile_context>
chip_gen: v6e
topology: v6e:2x2x1
jax: 0.10.0
libtpu: 0.0.40
codegen_flags: <defaults>
</compile_context>

<pallas_src>
import jax
import jax.numpy as jnp
from jax.experimental import pallas as pl
from jax.experimental.pallas import tpu as pltpu


def _round_up(x, m):
    return ((x + m - 1) // m) * m


def _cdiv(a, b):
    return (a + b - 1) // b


# VMEM budgets (bytes). Conservative so they hold on every generation:
#   v5e/v6e: 128 MiB physical; v7x: 64 MiB physical / 32 MiB scoped default.
_EMB_RESIDENT_BUDGET = 12 << 20   # keep whole weight block resident below this
_EMB_TILE_BUDGET = 6 << 20        # per-N-tile weight block target when tiling N
_VMEM_LIMIT_CAP = 60 << 20        # never request more than v7x physical VMEM


def type_encoder_kernel(x_ref, emb_ref, o_ref):
    """sigmoid(x @ emb) for one (batch-tile, type-tile).

    x_ref   : [TM, K_pad]   bf16 VMEM (streamed along the batch grid axis)
    emb_ref : [K_pad, TN]   bf16 VMEM (resident / single-buffered when TN == N_pad)
    o_ref   : [TM, TN]      f32  VMEM
    """
    scores = jnp.dot(
        x_ref[...], emb_ref[...], preferred_element_type=jnp.float32
    )  # f32 accumulation on the MXU
    o_ref[...] = jax.nn.sigmoid(scores).astype(o_ref.dtype)


def prepare_typeembeds(typeembeds):
    """One-time weight prep: transpose, zero-pad (K, N to 128) and cast to bf16.

    Call this at parameter-init / checkpoint-load time, NOT per forward call,
    so the forward pays no extra transpose/pad HBM traffic for the reused
    weight matrix.  Returns (emb_t[K_pad, N_pad] bf16, numtypes, typedim, tn).
    """
    numtypes, typedim = typeembeds.shape
    k_pad = _round_up(typedim, 128)

    # Choose the N tile: keep the whole weight block resident in VMEM when it
    # is small; otherwise tile N so each (double-buffered) weight tile stays
    # inside the per-tile budget -- required on v7x (64 MiB physical VMEM).
    n_pad0 = _round_up(numtypes, 128)
    if k_pad * n_pad0 * 2 <= _EMB_RESIDENT_BUDGET:
        tn = n_pad0
    else:
        tn = max(128, (_EMB_TILE_BUDGET // (k_pad * 2)) // 128 * 128)
        tn = min(tn, n_pad0)
    n_pad = _round_up(numtypes, tn)

    emb_bf = typeembeds.astype(jnp.bfloat16).T          # [typedim, numtypes]
    if typedim == k_pad and numtypes == n_pad:
        emb_t = emb_bf                                    # no pad copy needed
    else:
        emb_t = jnp.zeros((k_pad, n_pad), jnp.bfloat16).at[
            :typedim, :numtypes
        ].set(emb_bf)
    return emb_t, numtypes, typedim, tn


def type_encoder_forward(input_vecs, prepared, *, tm_cap=512,
                         out_dtype=jnp.float32):
    """input_vecs: [bs, hsize] (any float dtype); prepared = prepare_typeembeds(W).
    Returns type_probs: [bs, numtypes] in out_dtype (default f32)."""
    emb_t, numtypes, typedim, tn = prepared
    k_pad, n_pad = emb_t.shape
    bs, hsize = input_vecs.shape
    assert hsize == typedim, "typedim must equal input hidden size"

    # Divisor-aware batch tile: pad waste < one tile, 16-aligned for bf16.
    m_tiles = max(1, _cdiv(bs, tm_cap))
    tm = _round_up(_cdiv(bs, m_tiles), 16)
    m_pad = _round_up(bs, tm)

    # Stream x as bf16 (memory-bound: half the HBM bytes); pad only if needed.
    x_bf = input_vecs.astype(jnp.bfloat16)
    if m_pad != bs or k_pad != hsize:
        x_bf = jnp.pad(x_bf, ((0, m_pad - bs), (0, k_pad - hsize)))

    n_tiles = n_pad // tn
    grid = (m_pad // tm, n_tiles)

    # Weight block is grid-invariant when N is untiled -> single-buffer it
    # (saves a full K_pad*N_pad copy of VMEM).  Otherwise default buffering.
    emb_resident = n_tiles == 1

    out_bytes = jnp.dtype(out_dtype).itemsize
    cost = pl.CostEstimate(
        flops=2 * m_pad * n_pad * k_pad,
        transcendentals=m_pad * n_pad,                   # sigmoid -> exp on EUP
        bytes_accessed=(m_pad * k_pad * 2 + k_pad * n_pad * 2
                        + m_pad * n_pad * out_bytes),
    )

    emb_buf = 1 if emb_resident else 2
    vmem_need = (2 * tm * k_pad * 2            # double-buffered x tiles (bf16)
                 + emb_buf * k_pad * tn * 2    # weight tile(s) (bf16)
                 + 2 * tm * tn * out_bytes)    # double-buffered output tiles
    vmem_limit = int(min(max(2 * vmem_need, 32 << 20), _VMEM_LIMIT_CAP))

    def _build(emb_pipeline_mode):
        emb_kwargs = {}
        if emb_pipeline_mode is not None:
            emb_kwargs["pipeline_mode"] = emb_pipeline_mode
        return pl.pallas_call(
            type_encoder_kernel,
            out_shape=jax.ShapeDtypeStruct((m_pad, n_pad), out_dtype),
            grid_spec=pltpu.PrefetchScalarGridSpec(
                num_scalar_prefetch=0,
                grid=grid,
                in_specs=[
                    # x: one batch tile per i step, resident across j.
                    pl.BlockSpec((tm, k_pad), lambda i, j: (i, 0)),
                    # emb: constant across i; resident (and single-buffered)
                    # when n_tiles == 1, streamed per-j otherwise.
                    pl.BlockSpec((k_pad, tn), lambda i, j: (0, j), **emb_kwargs),
                ],
                out_specs=pl.BlockSpec((tm, tn), lambda i, j: (i, j)),
            ),
            compiler_params=pltpu.CompilerParams(
                dimension_semantics=("parallel", "arbitrary"),
                vmem_limit_bytes=vmem_limit,
            ),
            cost_estimate=cost,
        )

    try:
        out = _build(pl.Buffered(1) if emb_resident else None)(x_bf, emb_t)
    except Exception:
        # Fallback: default (double) buffering for the weight block.
        out = _build(None)(x_bf, emb_t)

    # Slice off batch padding and zero-padded type columns (sigmoid(0)=0.5)
    # only when padding was actually added (no gratuitous output copy).
    if m_pad == bs and n_pad == numtypes:
        return out
    return out[:bs, :numtypes]


def init_typeembeds(key, numtypes, typedim, init_range):
    # Matches self.typeembeds.data.uniform_(-init_range, init_range)
    return jax.random.uniform(
        key, (numtypes, typedim), dtype=jnp.float32,
        minval=-init_range, maxval=init_range,
    )


if __name__ == "__main__":
    # Small deterministic shapes consistent with the module.
    bs = 2
    hsize = 32          # typedim == hsize
    numtypes = 8
    init_range = 0.1

    key = jax.random.PRNGKey(0)
    k_emb, k_x = jax.random.split(key)

    typeembeds = init_typeembeds(k_emb, numtypes, hsize, init_range)
    input_vecs = jax.random.normal(k_x, (bs, hsize), dtype=jnp.float32)

    prepared = prepare_typeembeds(typeembeds)        # one-time weight prep
    type_probs = type_encoder_forward(input_vecs, prepared)
    type_probs = jax.block_until_ready(type_probs)

    # bf16-consistent reference (same streamed precision as the kernel).
    ref_bf16 = jax.nn.sigmoid(
        jnp.dot(input_vecs.astype(jnp.bfloat16),
                typeembeds.astype(jnp.bfloat16).T,
                preferred_element_type=jnp.float32))
    # Full-f32 PyTorch-equivalent reference (looser tolerance: bf16 streaming).
    ref_f32 = jax.nn.sigmoid(input_vecs @ typeembeds.T)

    assert type_probs.shape == (bs, numtypes)
    assert jnp.allclose(type_probs, ref_bf16, atol=1e-4, rtol=1e-4)
    assert jnp.allclose(type_probs, ref_f32, atol=2e-2, rtol=2e-2)

    print("KERNEL_OK")
</pallas_src>

<mosaic_0001>
module attributes {stable_mosaic.version = 11 : i64} {
  func.func @type_encoder_kernel(%arg0: i32, %arg1: i32, %arg2: memref<16x128xbf16, #tpu.memory_space<vmem>>, %arg3: memref<128x128xbf16, #tpu.memory_space<vmem>>, %arg4: memref<16x128xf32, #tpu.memory_space<vmem>>) attributes {dimension_semantics = [#tpu.dimension_semantics<parallel>, #tpu.dimension_semantics<arbitrary>], iteration_bounds = array<i64: 1, 1>, scalar_prefetch = 0 : i64, scratch_operands = 0 : i64, tpu.core_type = #tpu.core_type<tc>, window_params = [{transform_indices = @transform_0, window_bounds = array<i64: 16, 128>}, {pipeline_mode = #tpu.pipeline_mode<synchronous>, transform_indices = @transform_1, window_bounds = array<i64: 128, 128>}, {transform_indices = @transform_2, window_bounds = array<i64: 16, 128>}]} {
    %c0 = arith.constant 0 : index
    %c0_0 = arith.constant 0 : index
    %0 = vector.load %arg2[%c0, %c0_0] : memref<16x128xbf16, #tpu.memory_space<vmem>>, vector<16x128xbf16>
    %c0_1 = arith.constant 0 : index
    %c0_2 = arith.constant 0 : index
    %1 = vector.load %arg3[%c0_1, %c0_2] : memref<128x128xbf16, #tpu.memory_space<vmem>>, vector<128x128xbf16>
    %cst = arith.constant dense<0.000000e+00> : vector<16x128xf32>
    %2 = tpu.matmul %0, %1, %cst {dimension_numbers = #tpu.dot_dimension_numbers<[1], [0], [0], [1], [0, 0, 1, 1], [], []>} : vector<16x128xbf16>, vector<128x128xbf16>, vector<16x128xf32> -> vector<16x128xf32>
    %3 = arith.negf %2 : vector<16x128xf32>
    %4 = math.exp %3 : vector<16x128xf32>
    %cst_3 = arith.constant 1.000000e+00 : f32
    %5 = vector.broadcast %cst_3 : f32 to vector<16x128xf32>
    %6 = arith.addf %5, %4 : vector<16x128xf32>
    %7 = arith.divf %5, %6 : vector<16x128xf32>
    %c0_4 = arith.constant 0 : index
    %c0_5 = arith.constant 0 : index
    %8 = vector.load %arg4[%c0_4, %c0_5] : memref<16x128xf32, #tpu.memory_space<vmem>>, vector<16x128xf32>
    tpu.vector_store %arg4[%c0_4, %c0_5], %7 {strides = array<i32>} : memref<16x128xf32, #tpu.memory_space<vmem>>, vector<16x128xf32>,
    return
  }
  func.func @transform_0(%arg0: i32, %arg1: i32) -> (i32, i32) {
    %c0_i32 = arith.constant 0 : i32
    %c0_i32_0 = arith.constant 0 : i32
    return %arg0, %c0_i32 : i32, i32
  }
  func.func @transform_1(%arg0: i32, %arg1: i32) -> (i32, i32) {
    %c0_i32 = arith.constant 0 : i32
    %c0_i32_0 = arith.constant 0 : i32
    return %c0_i32, %arg1 : i32, i32
  }
  func.func @transform_2(%arg0: i32, %arg1: i32) -> (i32, i32) {
    %c0_i32 = arith.constant 0 : i32
    return %arg0, %arg1 : i32, i32
  }
}

module attributes {stable_mosaic.version = 11 : i64} {
  func.func @type_encoder_kernel(%arg0: i32, %arg1: i32, %arg2: memref<16x128xbf16, #tpu.memory_space<vmem>>, %arg3: memref<128x128xbf16, #tpu.memory_space<vmem>>, %arg4: memref<16x128xf32, #tpu.memory_space<vmem>>) attributes {dimension_semantics = [#tpu.dimension_semantics<parallel>, #tpu.dimension_semantics<arbitrary>], iteration_bounds = array<i64: 1, 1>, scalar_prefetch = 0 : i64, scratch_operands = 0 : i64, tpu.core_type = #tpu.core_type<tc>, window_params = [{transform_indices = @transform_0, window_bounds = array<i64: 16, 128>}, {transform_indices = @transform_1, window_bounds = array<i64: 128, 128>}, {transform_indices = @transform_2, window_bounds = array<i64: 16, 128>}]} {
    %c0 = arith.constant 0 : index
    %c0_0 = arith.constant 0 : index
    %0 = vector.load %arg2[%c0, %c0_0] : memref<16x128xbf16, #tpu.memory_space<vmem>>, vector<16x128xbf16>
    %c0_1 = arith.constant 0 : index
    %c0_2 = arith.constant 0 : index
    %1 = vector.load %arg3[%c0_1, %c0_2] : memref<128x128xbf16, #tpu.memory_space<vmem>>, vector<128x128xbf16>
    %cst = arith.constant dense<0.000000e+00> : vector<16x128xf32>
    %2 = tpu.matmul %0, %1, %cst {dimension_numbers = #tpu.dot_dimension_numbers<[1], [0], [0], [1], [0, 0, 1, 1], [], []>} : vector<16x128xbf16>, vector<128x128xbf16>, vector<16x128xf32> -> vector<16x128xf32>
    %3 = arith.negf %2 : vector<16x128xf32>
    %4 = math.exp %3 : vector<16x128xf32>
    %cst_3 = arith.constant 1.000000e+00 : f32
    %5 = vector.broadcast %cst_3 : f32 to vector<16x128xf32>
    %6 = arith.addf %5, %4 : vector<16x128xf32>
    %7 = arith.divf %5, %6 : vector<16x128xf32>
    %c0_4 = arith.constant 0 : index
    %c0_5 = arith.constant 0 : index
    %8 = vector.load %arg4[%c0_4, %c0_5] : memref<16x128xf32, #tpu.memory_space<vmem>>, vector<16x128xf32>
    tpu.vector_store %arg4[%c0_4, %c0_5], %7 {strides = array<i32>} : memref<16x128xf32, #tpu.memory_space<vmem>>, vector<16x128xf32>,
    return
  }
  func.func @transform_0(%arg0: i32, %arg1: i32) -> (i32, i32) {
    %c0_i32 = arith.constant 0 : i32
    %c0_i32_0 = arith.constant 0 : i32
    return %arg0, %c0_i32 : i32, i32
  }
  func.func @transform_1(%arg0: i32, %arg1: i32) -> (i32, i32) {
    %c0_i32 = arith.constant 0 : i32
    %c0_i32_0 = arith.constant 0 : i32
    return %c0_i32, %arg1 : i32, i32
  }
  func.func @transform_2(%arg0: i32, %arg1: i32) -> (i32, i32) {
    %c0_i32 = arith.constant 0 : i32
    return %arg0, %arg1 : i32, i32
  }
}

</mosaic_0001>

<llo_original>
// kernel: tpu_custom_call.1
$region0: #{tpu_custom_call.1}
  #allocation0 [shape = 'u32[]', space=smem, size = 0x4, offset = 0x4, fixed_abs, tag = 'smem constant byte address 0x4 - core index']
  #allocation1 [shape = 'u32[144,128]{1,0:T(1,128)}', space=vmem, size = 0x12000, scoped, tag = 'internal scratch']
  %s0 = inlined_call_operand.hbm [shape: bf16[16,128], index: 0, kind: input, shape index: {}]
  %s1 = inlined_call_operand.hbm [shape: bf16[128,128], index: 1, kind: input, shape index: {}]
  %s2 = inlined_call_operand.hbm [shape: f32[16,128], index: 2, kind: output, shape index: {}]
  %s3 = sld [smem:[#allocation0]]
  $region26: #{tpu_custom_call.1} parent=0
    _
  %s5 = ssub.s32 1, %s3
  %s6 = scalar_select 0, %s5, %s3
  $region1: #{tpu_custom_call.1} parent=0
    #allocation2 [shape = 'u8[4096]{0}', space=vmem, size = 0x1000, scoped, tag = 'input window, operand 0, single buffered']
    #allocation3 [shape = 's32[1]{0}', space=sflag, size = 0x4, scoped, tag = 'scoped memory for tpu_custom_call.1']
    #allocation4 [shape = 's32[1]{0}', space=sflag, size = 0x4, scoped, tag = 'scoped memory for tpu_custom_call.1']
    #allocation5 [shape = 'u8[32768]{0}', space=vmem, size = 0x8000, scoped, tag = 'input window, operand 1, single buffered']
    #allocation6 [shape = 's32[1]{0}', space=sflag, size = 0x4, scoped, tag = 'scoped memory for tpu_custom_call.1']
    #allocation7 [shape = 'u8[8192]{0}', space=vmem, size = 0x2000, scoped, tag = 'output window, operand 0, single buffered']
    %7 = vsyncpa [#allocation3], 0
    %8 = vsyncpa [#allocation6], 0
    %9 = vsyncpa [#allocation4], 0
    // Predicated region
    $region2: #{tpu_custom_call.1} parent=1 // pred_check
      _
    $region3: #{tpu_custom_call.1} parent=1 // pred_check_branch
      %11 = sbr.rel (0) target = $region5
    $region4: #{tpu_custom_call.1} parent=1 // pred_region
      %s13 = ssub.s32 128, 128
      %14 = vsyncadd [#allocation3], %s13
      %s15 = sshll.u32 [#allocation2], 4
      %s16 = int_to_ptr.vmem [resolvable:$true] %s15
      %21 = dma.hbm_to_vmem [thread:$0]  %s0, 128, %s16, [#allocation3], 64, 64, 4
    $region5: #{tpu_custom_call.1} parent=1 // pred_fallthru
      _
    // Predicated region
    $region6: #{tpu_custom_call.1} parent=1 // pred_check
      _
    $region7: #{tpu_custom_call.1} parent=1 // pred_check_branch
      %23 = sbr.rel (0) target = $region9
    $region8: #{tpu_custom_call.1} parent=1 // pred_region
      %s25 = ssub.s32 1024, 1024
      %26 = vsyncadd [#allocation6], %s25
      %s27 = sshll.u32 [#allocation5], 4
      %s28 = int_to_ptr.vmem [resolvable:$true] %s27
      %33 = dma.hbm_to_vmem [thread:$0]  %s1, 1024, %s28, [#allocation6], 64, 64, 4
    $region9: #{tpu_custom_call.1} parent=1 // pred_fallthru
      _
    // Predicated region
    $region10: #{tpu_custom_call.1} parent=1 // pred_check
      _
    $region11: #{tpu_custom_call.1} parent=1 // pred_check_branch
      %35 = sbr.rel (0) target = $region13
    $region12: #{tpu_custom_call.1} parent=1 // pred_region
      %36 = dma.done [#allocation3], 128
    $region13: #{tpu_custom_call.1} parent=1 // pred_fallthru
      _
    // Predicated region
    $region14: #{tpu_custom_call.1} parent=1 // pred_check
      _
    $region15: #{tpu_custom_call.1} parent=1 // pred_check_branch
      %38 = sbr.rel (0) target = $region17
    $region16: #{tpu_custom_call.1} parent=1 // pred_region
      %39 = dma.done [#allocation6], 1024
    $region17: #{tpu_custom_call.1} parent=1 // pred_fallthru
      _
    %v41 = vld [vmem:[#allocation2] sm:$0xf]
    %v42 = vld [vmem:[#allocation2 + $0x4] sm:$0xf]
    %v43 = vld [vmem:[#allocation5] sm:$0xf]
    %v44 = vld [vmem:[#allocation5 + $0x4] sm:$0xf]
    %v45 = vld [vmem:[#allocation5 + $0x8] sm:$0xf]
    %v46 = vld [vmem:[#allocation5 + $0xc] sm:$0xf]
    %v47 = vld [vmem:[#allocation5 + $0x10] sm:$0xf]
    %v48 = vld [vmem:[#allocation5 + $0x14] sm:$0xf]
    %v49 = vld [vmem:[#allocation5 + $0x18] sm:$0xf]
    %v50 = vld [vmem:[#allocation5 + $0x1c] sm:$0xf]
    %v51 = vld [vmem:[#allocation5 + $0x20] sm:$0xf]
    %v52 = vld [vmem:[#allocation5 + $0x24] sm:$0xf]
    %v53 = vld [vmem:[#allocation5 + $0x28] sm:$0xf]
    %v54 = vld [vmem:[#allocation5 + $0x2c] sm:$0xf]
    %v55 = vld [vmem:[#allocation5 + $0x30] sm:$0xf]
    %v56 = vld [vmem:[#allocation5 + $0x34] sm:$0xf]
    %v57 = vld [vmem:[#allocation5 + $0x38] sm:$0xf]
    %v58 = vld [vmem:[#allocation5 + $0x3c] sm:$0xf]
    %v61 = vunpack.c.l.b16 %v41
    %v62 = vunpack.c.l.b16 %v42
    %v63 = vpack.c.b16 %v62, %v61
    %v81 = vunpack.c.l.b16 %v43
    %v82 = vunpack.c.l.b16 %v44
    %v83 = vunpack.c.l.b16 %v45
    %v84 = vunpack.c.l.b16 %v46
    %v85 = vunpack.c.l.b16 %v47
    %v86 = vunpack.c.l.b16 %v48
    %v87 = vunpack.c.l.b16 %v49
    %v88 = vunpack.c.l.b16 %v50
    %v89 = vunpack.c.l.b16 %v51
    %v90 = vunpack.c.l.b16 %v52
    %v91 = vunpack.c.l.b16 %v53
    %v92 = vunpack.c.l.b16 %v54
    %v93 = vunpack.c.l.b16 %v55
    %v94 = vunpack.c.l.b16 %v56
    %v95 = vunpack.c.l.b16 %v57
    %v96 = vunpack.c.l.b16 %v58
    %v97 = vpack.c.b16 %v82, %v81
    %v98 = vpack.c.b16 %v84, %v83
    %v99 = vpack.c.b16 %v86, %v85
    %v100 = vpack.c.b16 %v88, %v87
    %v101 = vpack.c.b16 %v90, %v89
    %v102 = vpack.c.b16 %v92, %v91
    %v103 = vpack.c.b16 %v94, %v93
    %v104 = vpack.c.b16 %v96, %v95
    %113 = vmatprep.subr.bf16.mxu0 0
    %114 = vmatpush1.bf16.msra.mxu0 %v104
    %115 = vmatprep.subr.bf16.mxu0 0
    %116 = vmatpush1.bf16.msra.mxu0 %v103
    %117 = vmatprep.subr.bf16.mxu0 0
    %118 = vmatpush1.bf16.msra.mxu0 %v102
    %119 = vmatprep.subr.bf16.mxu0 0
    %120 = vmatpush1.bf16.msra.mxu0 %v101
    %121 = vmatprep.subr.bf16.mxu0 0
    %122 = vmatpush1.bf16.msra.mxu0 %v100
    %123 = vmatprep.subr.bf16.mxu0 0
    %124 = vmatpush1.bf16.msra.mxu0 %v99
    %125 = vmatprep.subr.bf16.mxu0 0
    %126 = vmatpush1.bf16.msra.mxu0 %v98
    %127 = vmatprep.subr.bf16.mxu0 0
    %128 = vmatpush1.bf16.msra.mxu0 %v97
    %129 = vmatprep.subr.bf16.mxu0 0
    %130 = vmatpush2.bf16.msra.mxu0 0
    %131 = vmatprep.subr.bf16.mxu0 0
    %132 = vmatpush2.bf16.msra.mxu0 0
    %133 = vmatprep.subr.bf16.mxu0 0
    %134 = vmatpush2.bf16.msra.mxu0 0
    %135 = vmatprep.subr.bf16.mxu0 0
    %136 = vmatpush2.bf16.msra.mxu0 0
    %137 = vmatprep.subr.bf16.mxu0 0
    %138 = vmatpush2.bf16.msra.mxu0 0
    %139 = vmatprep.subr.bf16.mxu0 0
    %140 = vmatpush2.bf16.msra.mxu0 0
    %141 = vmatprep.subr.bf16.mxu0 0
    %142 = vmatpush2.bf16.msra.mxu0 0
    %143 = vmatprep.subr.bf16.mxu0 0
    %144 = vmatpush2.bf16.msra.mxu0 0
    %145 = vmatprep.mubr.bf16.mxu0 0
    %146 = vmatmul.mubr.bf16.gmra.mxu0 %v63
    %v147 = vpop.f32.mrf.mxu0
    %v148 = vadd.f32 0.0, %v147
    %v149 = vpop.f32.mrf.mxu0
    %v150 = vpop.f32.mrf.mxu0
    %v151 = vadd.f32 0.0, %v150
    %v152 = vpop.f32.mrf.mxu0
    %153 = vdwg.mxu0
    %v154 = vxor.u32 %v148, 2147483648
    %v155 = vxor.u32 %v151, 2147483648
    %v156 = vmul.f32 %v154, 1.442695
    %v157 = vpow.pop %v156
    %v158 = vmul.f32 %v155, 1.442695
    %v159 = vpow.pop %v158
    %v160 = vadd.f32 %v157, 1.0
    %v161 = vadd.f32 %v159, 1.0
    %v162 = vrcp.pop %v160
    %v163 = vmul.f32 1.0, %v162
    %v164 = vrcp.pop %v161
    %v165 = vmul.f32 1.0, %v164
    %166 = vst [vmem:[#allocation7] sm:$0xff] %v163
    %167 = vst [vmem:[#allocation7 + $0x8] sm:$0xff] %v165
    // Predicated region
    $region18: #{tpu_custom_call.1} parent=1 // pred_check
      _
    $region19: #{tpu_custom_call.1} parent=1 // pred_check_branch
      %169 = sbr.rel (0) target = $region21
    $region20: #{tpu_custom_call.1} parent=1 // pred_region
      %s171 = ssub.s32 256, 256
      %172 = vsyncadd [#allocation4], %s171
      %s173 = sshll.u32 [#allocation7], 4
      %s174 = int_to_ptr.vmem [resolvable:$true] %s173
      %179 = dma.vmem_to_hbm [thread:$0]  %s174, 256, %s2, [#allocation4], 128, 128, 8
    $region21: #{tpu_custom_call.1} parent=1 // pred_fallthru
      _
    // Predicated region
    $region22: #{tpu_custom_call.1} parent=1 // pred_check
      _
    $region23: #{tpu_custom_call.1} parent=1 // pred_check_branch
      %181 = sbr.rel (0) target = $region25
    $region24: #{tpu_custom_call.1} parent=1 // pred_region
      %182 = dma.done [#allocation4], 256
    $region25: #{tpu_custom_call.1} parent=1 // pred_fallthru
      _
    %183 = vsyncpa [#allocation3], 1
    %184 = vsyncpa [#allocation6], 1
    %185 = vsyncpa [#allocation4], 1

// kernel: tpu_custom_call.1
$region0: #{tpu_custom_call.1}
  #allocation0 [shape = 'u32[]', space=smem, size = 0x4, offset = 0x4, fixed_abs, tag = 'smem constant byte address 0x4 - core index']
  #allocation1 [shape = 'u32[144,128]{1,0:T(1,128)}', space=vmem, size = 0x12000, scoped, tag = 'internal scratch']
  %s0 = inlined_call_operand.hbm [shape: bf16[16,128], index: 0, kind: input, shape index: {}]
  %s1 = inlined_call_operand.hbm [shape: bf16[128,128], index: 1, kind: input, shape index: {}]
  %s2 = inlined_call_operand.hbm [shape: f32[16,128], index: 2, kind: output, shape index: {}]
  %s3 = sld [smem:[#allocation0]]
  $region26: #{tpu_custom_call.1} parent=0
    _
  %s5 = ssub.s32 1, %s3
  %s6 = scalar_select 0, %s5, %s3
  $region1: #{tpu_custom_call.1} parent=0
    #allocation2 [shape = 'u8[4096]{0}', space=vmem, size = 0x1000, scoped, tag = 'input window, operand 0, single buffered']
    #allocation3 [shape = 's32[1]{0}', space=sflag, size = 0x4, scoped, tag = 'scoped memory for tpu_custom_call.1']
    #allocation4 [shape = 's32[1]{0}', space=sflag, size = 0x4, scoped, tag = 'scoped memory for tpu_custom_call.1']
    #allocation5 [shape = 'u8[32768]{0}', space=vmem, size = 0x8000, scoped, tag = 'input window, operand 1, single buffered']
    #allocation6 [shape = 's32[1]{0}', space=sflag, size = 0x4, scoped, tag = 'scoped memory for tpu_custom_call.1']
    #allocation7 [shape = 'u8[8192]{0}', space=vmem, size = 0x2000, scoped, tag = 'output window, operand 0, single buffered']
    %7 = vsyncpa [#allocation3], 0
    %8 = vsyncpa [#allocation6], 0
    %9 = vsyncpa [#allocation4], 0
    // Predicated region
    $region2: #{tpu_custom_call.1} parent=1 // pred_check
      _
    $region3: #{tpu_custom_call.1} parent=1 // pred_check_branch
      %11 = sbr.rel (0) target = $region5
    $region4: #{tpu_custom_call.1} parent=1 // pred_region
      %s13 = ssub.s32 128, 128
      %14 = vsyncadd [#allocation3], %s13
      %s15 = sshll.u32 [#allocation2], 4
      %s16 = int_to_ptr.vmem [resolvable:$true] %s15
      %21 = dma.hbm_to_vmem [thread:$0]  %s0, 128, %s16, [#allocation3], 64, 64, 4
    $region5: #{tpu_custom_call.1} parent=1 // pred_fallthru
      _
    // Predicated region
    $region6: #{tpu_custom_call.1} parent=1 // pred_check
      _
    $region7: #{tpu_custom_call.1} parent=1 // pred_check_branch
      %23 = sbr.rel (0) target = $region9
    $region8: #{tpu_custom_call.1} parent=1 // pred_region
      %s25 = ssub.s32 1024, 1024
      %26 = vsyncadd [#allocation6], %s25
      %s27 = sshll.u32 [#allocation5], 4
      %s28 = int_to_ptr.vmem [resolvable:$true] %s27
      %33 = dma.hbm_to_vmem [thread:$0]  %s1, 1024, %s28, [#allocation6], 64, 64, 4
    $region9: #{tpu_custom_call.1} parent=1 // pred_fallthru
      _
    // Predicated region
    $region10: #{tpu_custom_call.1} parent=1 // pred_check
      _
    $region11: #{tpu_custom_call.1} parent=1 // pred_check_branch
      %35 = sbr.rel (0) target = $region13
    $region12: #{tpu_custom_call.1} parent=1 // pred_region
      %36 = dma.done [#allocation3], 128
    $region13: #{tpu_custom_call.1} parent=1 // pred_fallthru
      _
    // Predicated region
    $region14: #{tpu_custom_call.1} parent=1 // pred_check
      _
    $region15: #{tpu_custom_call.1} parent=1 // pred_check_branch
      %38 = sbr.rel (0) target = $region17
    $region16: #{tpu_custom_call.1} parent=1 // pred_region
      %39 = dma.done [#allocation6], 1024
    $region17: #{tpu_custom_call.1} parent=1 // pred_fallthru
      _
    %v41 = vld [vmem:[#allocation2] sm:$0xf]
    %v42 = vld [vmem:[#allocation2 + $0x4] sm:$0xf]
    %v43 = vld [vmem:[#allocation5] sm:$0xf]
    %v44 = vld [vmem:[#allocation5 + $0x4] sm:$0xf]
    %v45 = vld [vmem:[#allocation5 + $0x8] sm:$0xf]
    %v46 = vld [vmem:[#allocation5 + $0xc] sm:$0xf]
    %v47 = vld [vmem:[#allocation5 + $0x10] sm:$0xf]
    %v48 = vld [vmem:[#allocation5 + $0x14] sm:$0xf]
    %v49 = vld [vmem:[#allocation5 + $0x18] sm:$0xf]
    %v50 = vld [vmem:[#allocation5 + $0x1c] sm:$0xf]
    %v51 = vld [vmem:[#allocation5 + $0x20] sm:$0xf]
    %v52 = vld [vmem:[#allocation5 + $0x24] sm:$0xf]
    %v53 = vld [vmem:[#allocation5 + $0x28] sm:$0xf]
    %v54 = vld [vmem:[#allocation5 + $0x2c] sm:$0xf]
    %v55 = vld [vmem:[#allocation5 + $0x30] sm:$0xf]
    %v56 = vld [vmem:[#allocation5 + $0x34] sm:$0xf]
    %v57 = vld [vmem:[#allocation5 + $0x38] sm:$0xf]
    %v58 = vld [vmem:[#allocation5 + $0x3c] sm:$0xf]
    %v61 = vunpack.c.l.b16 %v41
    %v62 = vunpack.c.l.b16 %v42
    %v63 = vpack.c.b16 %v62, %v61
    %v81 = vunpack.c.l.b16 %v43
    %v82 = vunpack.c.l.b16 %v44
    %v83 = vunpack.c.l.b16 %v45
    %v84 = vunpack.c.l.b16 %v46
    %v85 = vunpack.c.l.b16 %v47
    %v86 = vunpack.c.l.b16 %v48
    %v87 = vunpack.c.l.b16 %v49
    %v88 = vunpack.c.l.b16 %v50
    %v89 = vunpack.c.l.b16 %v51
    %v90 = vunpack.c.l.b16 %v52
    %v91 = vunpack.c.l.b16 %v53
    %v92 = vunpack.c.l.b16 %v54
    %v93 = vunpack.c.l.b16 %v55
    %v94 = vunpack.c.l.b16 %v56
    %v95 = vunpack.c.l.b16 %v57
    %v96 = vunpack.c.l.b16 %v58
    %v97 = vpack.c.b16 %v82, %v81
    %v98 = vpack.c.b16 %v84, %v83
    %v99 = vpack.c.b16 %v86, %v85
    %v100 = vpack.c.b16 %v88, %v87
    %v101 = vpack.c.b16 %v90, %v89
    %v102 = vpack.c.b16 %v92, %v91
    %v103 = vpack.c.b16 %v94, %v93
    %v104 = vpack.c.b16 %v96, %v95
    %113 = vmatprep.subr.bf16.mxu0 0
    %114 = vmatpush1.bf16.msra.mxu0 %v104
    %115 = vmatprep.subr.bf16.mxu0 0
    %116 = vmatpush1.bf16.msra.mxu0 %v103
    %117 = vmatprep.subr.bf16.mxu0 0
    %118 = vmatpush1.bf16.msra.mxu0 %v102
    %119 = vmatprep.subr.bf16.mxu0 0
    %120 = vmatpush1.bf16.msra.mxu0 %v101
    %121 = vmatprep.subr.bf16.mxu0 0
    %122 = vmatpush1.bf16.msra.mxu0 %v100
    %123 = vmatprep.subr.bf16.mxu0 0
    %124 = vmatpush1.bf16.msra.mxu0 %v99
    %125 = vmatprep.subr.bf16.mxu0 0
    %126 = vmatpush1.bf16.msra.mxu0 %v98
    %127 = vmatprep.subr.bf16.mxu0 0
    %128 = vmatpush1.bf16.msra.mxu0 %v97
    %129 = vmatprep.subr.bf16.mxu0 0
    %130 = vmatpush2.bf16.msra.mxu0 0
    %131 = vmatprep.subr.bf16.mxu0 0
    %132 = vmatpush2.bf16.msra.mxu0 0
    %133 = vmatprep.subr.bf16.mxu0 0
    %134 = vmatpush2.bf16.msra.mxu0 0
    %135 = vmatprep.subr.bf16.mxu0 0
    %136 = vmatpush2.bf16.msra.mxu0 0
    %137 = vmatprep.subr.bf16.mxu0 0
    %138 = vmatpush2.bf16.msra.mxu0 0
    %139 = vmatprep.subr.bf16.mxu0 0
    %140 = vmatpush2.bf16.msra.mxu0 0
    %141 = vmatprep.subr.bf16.mxu0 0
    %142 = vmatpush2.bf16.msra.mxu0 0
    %143 = vmatprep.subr.bf16.mxu0 0
    %144 = vmatpush2.bf16.msra.mxu0 0
    %145 = vmatprep.mubr.bf16.mxu0 0
    %146 = vmatmul.mubr.bf16.gmra.mxu0 %v63
    %v147 = vpop.f32.mrf.mxu0
    %v148 = vadd.f32 0.0, %v147
    %v149 = vpop.f32.mrf.mxu0
    %v150 = vpop.f32.mrf.mxu0
    %v151 = vadd.f32 0.0, %v150
    %v152 = vpop.f32.mrf.mxu0
    %153 = vdwg.mxu0
    %v154 = vxor.u32 %v148, 2147483648
    %v155 = vxor.u32 %v151, 2147483648
    %v156 = vmul.f32 %v154, 1.442695
    %v157 = vpow.pop %v156
    %v158 = vmul.f32 %v155, 1.442695
    %v159 = vpow.pop %v158
    %v160 = vadd.f32 %v157, 1.0
    %v161 = vadd.f32 %v159, 1.0
    %v162 = vrcp.pop %v160
    %v163 = vmul.f32 1.0, %v162
    %v164 = vrcp.pop %v161
    %v165 = vmul.f32 1.0, %v164
    %166 = vst [vmem:[#allocation7] sm:$0xff] %v163
    %167 = vst [vmem:[#allocation7 + $0x8] sm:$0xff] %v165
    // Predicated region
    $region18: #{tpu_custom_call.1} parent=1 // pred_check
      _
    $region19: #{tpu_custom_call.1} parent=1 // pred_check_branch
      %169 = sbr.rel (0) target = $region21
    $region20: #{tpu_custom_call.1} parent=1 // pred_region
      %s171 = ssub.s32 256, 256
      %172 = vsyncadd [#allocation4], %s171
      %s173 = sshll.u32 [#allocation7], 4
      %s174 = int_to_ptr.vmem [resolvable:$true] %s173
      %179 = dma.vmem_to_hbm [thread:$0]  %s174, 256, %s2, [#allocation4], 128, 128, 8
    $region21: #{tpu_custom_call.1} parent=1 // pred_fallthru
      _
    // Predicated region
    $region22: #{tpu_custom_call.1} parent=1 // pred_check
      _
    $region23: #{tpu_custom_call.1} parent=1 // pred_check_branch
      %181 = sbr.rel (0) target = $region25
    $region24: #{tpu_custom_call.1} parent=1 // pred_region
      %182 = dma.done [#allocation4], 256
    $region25: #{tpu_custom_call.1} parent=1 // pred_fallthru
      _
    %183 = vsyncpa [#allocation3], 1
    %184 = vsyncpa [#allocation6], 1
    %185 = vsyncpa [#allocation4], 1

</llo_original>
